<compile_context>
chip_gen: v6e
topology: v6e:2x2x1
jax: 0.10.0
libtpu: 0.0.40
codegen_flags: <defaults>
</compile_context>

<pallas_src>
import jax
import jax.numpy as jnp
from jax.experimental import pallas as pl
from jax.experimental.pallas import tpu as pltpu

NEG_INF = -1e9          # PyTorch reference replaces -inf with -1e9 before softmax
MIB = 1 << 20


def head_attention_kernel(xq_ref, xkv_ref, kbias_ref, cbias_ref,
                          wq_ref, wk_ref, wv_ref, out_ref, wei_ref):
    # xq_ref:   (Bb, TQ, C) bf16  query-tile rows of x
    # xkv_ref:  (Bb, T,  C) bf16  full-sequence x for keys/values
    # kbias_ref:(Bb, 1,  T) f32   additive key-padding bias (0 / -1e9)
    # cbias_ref:(TQ, T)     f32   additive causal bias tile (0 / -1e9)
    # w*_ref:   (C, H)      bf16  pre-transposed weights (Wq pre-scaled)
    # out_ref:  (Bb, TQ, H)
    # wei_ref:  (Bb, TQ, T)
    Bb, TQ, C = xq_ref.shape
    T = xkv_ref.shape[1]
    H = wq_ref.shape[1]

    # Flatten batch*rows so the MXU sees one fat M-dimension matmul per proj.
    xq = xq_ref[...].reshape(Bb * TQ, C)
    xkv = xkv_ref[...].reshape(Bb * T, C)

    q = jnp.dot(xq, wq_ref[...], preferred_element_type=jnp.float32)    # (Bb*TQ, H)
    k = jnp.dot(xkv, wk_ref[...], preferred_element_type=jnp.float32)   # (Bb*T,  H)
    v = jnp.dot(xkv, wv_ref[...], preferred_element_type=jnp.float32)   # (Bb*T,  H)

    q3 = q.reshape(Bb, TQ, H)
    k3 = k.reshape(Bb, T, H)
    v3 = v.reshape(Bb, T, H).astype(jnp.bfloat16)

    # scores = q @ k^T (scale already folded into Wq on the host)
    scores = jnp.einsum("bqh,bkh->bqk", q3, k3,
                        preferred_element_type=jnp.float32)              # (Bb, TQ, T)
    # Masking = two adds (causal tile + per-batch key-padding bias).
    scores = scores + cbias_ref[...][None, :, :] + kbias_ref[...]

    # Softmax over keys, f32; normalization via EUP reciprocal.
    m = jnp.max(scores, axis=-1, keepdims=True)
    e = jnp.exp(scores - m)
    s = jnp.sum(e, axis=-1, keepdims=True)
    inv = pl.reciprocal(s, approx=True)

    wei_ref[...] = (e * inv).astype(wei_ref.dtype)

    # out = (e @ v) * inv  — feed the MXU bf16, normalize the small result.
    ov = jnp.einsum("bqk,bkh->bqh", e.astype(jnp.bfloat16), v3,
                    preferred_element_type=jnp.float32)                  # (Bb, TQ, H)
    out_ref[...] = (ov * inv).astype(out_ref.dtype)


def _step_vmem_bytes(bb, tq, T, C, H, out_isz, wei_isz):
    """Rough per-grid-step VMEM footprint (double-buffered blocks + temporaries)."""
    bf16, f32 = 2, 4
    pipelined = 2 * (bb * tq * C * bf16       # x (query tile)
                     + bb * T * C * bf16      # x (keys/values)
                     + bb * T * f32           # key-padding bias
                     + tq * T * f32           # causal bias tile
                     + 3 * C * H * bf16       # weights
                     + bb * tq * H * out_isz  # out
                     + bb * tq * T * wei_isz)  # wei
    scratch = 2 * bb * tq * T * f32 + (bb * tq + 2 * bb * T) * H * f32
    return pipelined + scratch


def _choose_tiles(B, T, C, H, out_isz, wei_isz, budget):
    # Query tile: full T if it fits, else a divisor of T (multiple of 8, <=512).
    q_cands = [d for d in range(T, 0, -1)
               if T % d == 0 and (d == T or d % 8 == 0)]
    tq = T
    for d in q_cands:
        if d <= 512 and _step_vmem_bytes(1, d, T, C, H, out_isz, wei_isz) <= budget:
            tq = d
            break
    # Batch block: fatten the projection M-dimension (target ~256 rows/step).
    bb = 1
    for d in range(1, B + 1):
        if B % d:
            continue
        if d * T > max(256, T):
            break
        if _step_vmem_bytes(d, tq, T, C, H, out_isz, wei_isz) <= budget:
            bb = d
    return bb, tq


def head_forward(x, wq, wk, wv, attention_mask=None, wei_dtype=jnp.bfloat16):
    """x: [B, T, C]; wq/wk/wv: PyTorch Linear weights [H, C] (out, in);
    attention_mask: optional [B, T] (nonzero = attend). Returns (out, wei)."""
    B, T, C = x.shape
    H = wq.shape[0]
    scale = H ** -0.5

    # bf16 MXU operands; fold the softmax scale into Wq^T on the host.
    x_bf = x.astype(jnp.bfloat16)
    wqT = (jnp.transpose(wq) * scale).astype(jnp.bfloat16)
    wkT = jnp.transpose(wk).astype(jnp.bfloat16)
    wvT = jnp.transpose(wv).astype(jnp.bfloat16)

    # Additive key-padding bias (0 keep / -1e9 drop) and causal bias.
    if attention_mask is None:
        key_bias = jnp.zeros((B, 1, T), jnp.float32)
    else:
        key_bias = jnp.where(attention_mask != 0, 0.0, NEG_INF)
        key_bias = key_bias.astype(jnp.float32).reshape(B, 1, T)
    causal_bias = jnp.where(jnp.tril(jnp.ones((T, T), dtype=bool)),
                            0.0, NEG_INF).astype(jnp.float32)

    # Generation-aware VMEM budget with headroom (v7x 64 MiB -> ~56; v5e/v6e -> ~100).
    try:
        vmem_cap = int(pltpu.get_tpu_info().vmem_capacity_bytes)
    except Exception:
        vmem_cap = 64 * MIB
    vmem_ceiling = max(min(vmem_cap - 8 * MIB, 100 * MIB), 32 * MIB)

    out_isz = jnp.dtype(x.dtype).itemsize
    wei_isz = jnp.dtype(wei_dtype).itemsize
    Bb, tq = _choose_tiles(B, T, C, H, out_isz, wei_isz, vmem_ceiling)
    n_qt = T // tq

    need = _step_vmem_bytes(Bb, tq, T, C, H, out_isz, wei_isz)
    vmem_limit = int(min(max(need + 8 * MIB, 32 * MIB), vmem_ceiling))

    cost = pl.CostEstimate(
        flops=int(B * (2 * T * C * H                 # q projection
                       + n_qt * 2 * 2 * T * C * H    # k, v projections (per q-tile)
                       + 2 * 2 * T * T * H)),        # scores + out
        transcendentals=int(B * T * T),
        bytes_accessed=int(2 * B * T * C * (1 + n_qt)
                           + 4 * B * T + 4 * T * T + 2 * 3 * C * H
                           + out_isz * B * T * H + wei_isz * B * T * T),
    )

    out, wei = pl.pallas_call(
        head_attention_kernel,
        out_shape=(
            jax.ShapeDtypeStruct((B, T, H), x.dtype),
            jax.ShapeDtypeStruct((B, T, T), wei_dtype),
        ),
        grid_spec=pltpu.PrefetchScalarGridSpec(
            num_scalar_prefetch=0,
            grid=(B // Bb, n_qt),
            in_specs=[
                pl.BlockSpec((Bb, tq, C), lambda b, qi: (b, qi, 0)),  # x (queries)
                pl.BlockSpec((Bb, T, C), lambda b, qi: (b, 0, 0)),    # x (keys/vals)
                pl.BlockSpec((Bb, 1, T), lambda b, qi: (b, 0, 0)),    # key bias
                pl.BlockSpec((tq, T), lambda b, qi: (qi, 0)),         # causal bias
                pl.BlockSpec((C, H), lambda b, qi: (0, 0)),           # Wq^T (scaled)
                pl.BlockSpec((C, H), lambda b, qi: (0, 0)),           # Wk^T
                pl.BlockSpec((C, H), lambda b, qi: (0, 0)),           # Wv^T
            ],
            out_specs=(
                pl.BlockSpec((Bb, tq, H), lambda b, qi: (b, qi, 0)),  # out
                pl.BlockSpec((Bb, tq, T), lambda b, qi: (b, qi, 0)),  # wei
            ),
        ),
        compiler_params=pltpu.CompilerParams(
            dimension_semantics=("parallel", "parallel"),
            vmem_limit_bytes=vmem_limit,
        ),
        cost_estimate=cost,
    )(x_bf, x_bf, key_bias, causal_bias, wqT, wkT, wvT)

    return out, wei


def head_ref(x, wq, wk, wv, attention_mask=None):
    """Pure-JAX f32 reference matching the PyTorch Head forward (eval mode)."""
    B, T, C = x.shape
    k = jnp.einsum("btc,hc->bth", x, wk)
    q = jnp.einsum("btc,hc->bth", x, wq)
    v = jnp.einsum("btc,hc->bth", x, wv)
    wei = jnp.einsum("bth,bsh->bts", q, k) * (k.shape[-1] ** -0.5)
    keep = jnp.tril(jnp.ones((T, T), dtype=bool))[None, :, :]
    if attention_mask is not None:
        keep = jnp.logical_and(keep, (attention_mask != 0)[:, None, :])
    wei = jnp.where(keep, wei, NEG_INF)
    wei = jax.nn.softmax(wei, axis=-1)
    out = jnp.einsum("bts,bsh->bth", wei, v)
    return out, wei


if __name__ == "__main__":
    # head_size=16, n_embd=32, block_size=8 (seq len), dropout=0.0 (eval)
    B, T, C, H = 2, 8, 32, 16

    key = jax.random.PRNGKey(0)
    kx, kq, kk, kv = jax.random.split(key, 4)

    # Snap inputs to bf16-representable values so the kernel's bf16 MXU feed is
    # lossless w.r.t. the f32 reference (remaining deltas: bf16 e/v in the
    # second matmul, approx reciprocal, bf16 wei output).
    def snap(a):
        return a.astype(jnp.bfloat16).astype(jnp.float32)

    x = snap(jax.random.normal(kx, (B, T, C), dtype=jnp.float32))
    wq = snap(jax.random.normal(kq, (H, C), dtype=jnp.float32) * (C ** -0.5))
    wk = snap(jax.random.normal(kk, (H, C), dtype=jnp.float32) * (C ** -0.5))
    wv = snap(jax.random.normal(kv, (H, C), dtype=jnp.float32) * (C ** -0.5))

    # attention_mask: batch 1 has its last two key positions padded out.
    attention_mask = jnp.ones((B, T), dtype=jnp.float32).at[1, T - 2:].set(0.0)

    out, wei = head_forward(x, wq, wk, wv, attention_mask)
    out = jax.block_until_ready(out)
    wei = jax.block_until_ready(wei)

    ref_out, ref_wei = head_ref(x, wq, wk, wv, attention_mask)
    assert out.shape == (B, T, H) and wei.shape == (B, T, T)
    assert jnp.allclose(out.astype(jnp.float32), ref_out, atol=3e-2, rtol=3e-2), \
        "out mismatch"
    assert jnp.allclose(wei.astype(jnp.float32), ref_wei, atol=3e-2, rtol=3e-2), \
        "wei mismatch"

    # attention_mask=None path
    out2, wei2 = head_forward(x, wq, wk, wv, None)
    out2 = jax.block_until_ready(out2)
    wei2 = jax.block_until_ready(wei2)
    ref_out2, ref_wei2 = head_ref(x, wq, wk, wv, None)
    assert jnp.allclose(out2.astype(jnp.float32), ref_out2, atol=3e-2, rtol=3e-2), \
        "out mismatch (no mask)"
    assert jnp.allclose(wei2.astype(jnp.float32), ref_wei2, atol=3e-2, rtol=3e-2), \
        "wei mismatch (no mask)"

    print("KERNEL_OK")
</pallas_src>

<mosaic_0001>
module attributes {stable_mosaic.version = 11 : i64} {
  func.func @head_attention_kernel(%arg0: i32, %arg1: i32, %arg2: memref<2x8x32xbf16, #tpu.memory_space<vmem>>, %arg3: memref<2x8x32xbf16, #tpu.memory_space<vmem>>, %arg4: memref<2x1x8xf32, #tpu.memory_space<vmem>>, %arg5: memref<8x8xf32, #tpu.memory_space<vmem>>, %arg6: memref<32x16xbf16, #tpu.memory_space<vmem>>, %arg7: memref<32x16xbf16, #tpu.memory_space<vmem>>, %arg8: memref<32x16xbf16, #tpu.memory_space<vmem>>, %arg9: memref<2x8x16xf32, #tpu.memory_space<vmem>>, %arg10: memref<2x8x8xbf16, #tpu.memory_space<vmem>>) attributes {dimension_semantics = [#tpu.dimension_semantics<parallel>, #tpu.dimension_semantics<parallel>], iteration_bounds = array<i64: 1, 1>, scalar_prefetch = 0 : i64, scratch_operands = 0 : i64, tpu.core_type = #tpu.core_type<tc>, window_params = [{transform_indices = @transform_0, window_bounds = array<i64: 2, 8, 32>}, {transform_indices = @transform_1, window_bounds = array<i64: 2, 8, 32>}, {transform_indices = @transform_2, window_bounds = array<i64: 2, 1, 8>}, {transform_indices = @transform_3, window_bounds = array<i64: 8, 8>}, {pipeline_mode = #tpu.pipeline_mode<synchronous>, transform_indices = @transform_4, window_bounds = array<i64: 32, 16>}, {pipeline_mode = #tpu.pipeline_mode<synchronous>, transform_indices = @transform_5, window_bounds = array<i64: 32, 16>}, {pipeline_mode = #tpu.pipeline_mode<synchronous>, transform_indices = @transform_6, window_bounds = array<i64: 32, 16>}, {transform_indices = @transform_7, window_bounds = array<i64: 2, 8, 16>}, {transform_indices = @transform_8, window_bounds = array<i64: 2, 8, 8>}]} {
    %c0 = arith.constant 0 : index
    %c0_0 = arith.constant 0 : index
    %c0_1 = arith.constant 0 : index
    %0 = vector.load %arg2[%c0, %c0_0, %c0_1] : memref<2x8x32xbf16, #tpu.memory_space<vmem>>, vector<2x8x32xbf16>
    %1 = vector.shape_cast %0 : vector<2x8x32xbf16> to vector<16x32xbf16>
    %c0_2 = arith.constant 0 : index
    %c0_3 = arith.constant 0 : index
    %c0_4 = arith.constant 0 : index
    %2 = vector.load %arg3[%c0_2, %c0_3, %c0_4] : memref<2x8x32xbf16, #tpu.memory_space<vmem>>, vector<2x8x32xbf16>
    %3 = vector.shape_cast %2 : vector<2x8x32xbf16> to vector<16x32xbf16>
    %c0_5 = arith.constant 0 : index
    %c0_6 = arith.constant 0 : index
    %4 = vector.load %arg6[%c0_5, %c0_6] : memref<32x16xbf16, #tpu.memory_space<vmem>>, vector<32x16xbf16>
    %cst = arith.constant dense<0.000000e+00> : vector<16x16xf32>
    %5 = tpu.matmul %1, %4, %cst {dimension_numbers = #tpu.dot_dimension_numbers<[1], [0], [0], [1], [0, 0, 1, 1], [], []>} : vector<16x32xbf16>, vector<32x16xbf16>, vector<16x16xf32> -> vector<16x16xf32>
    %c0_7 = arith.constant 0 : index
    %c0_8 = arith.constant 0 : index
    %6 = vector.load %arg7[%c0_7, %c0_8] : memref<32x16xbf16, #tpu.memory_space<vmem>>, vector<32x16xbf16>
    %cst_9 = arith.constant dense<0.000000e+00> : vector<16x16xf32>
    %7 = tpu.matmul %3, %6, %cst_9 {dimension_numbers = #tpu.dot_dimension_numbers<[1], [0], [0], [1], [0, 0, 1, 1], [], []>} : vector<16x32xbf16>, vector<32x16xbf16>, vector<16x16xf32> -> vector<16x16xf32>
    %c0_10 = arith.constant 0 : index
    %c0_11 = arith.constant 0 : index
    %8 = vector.load %arg8[%c0_10, %c0_11] : memref<32x16xbf16, #tpu.memory_space<vmem>>, vector<32x16xbf16>
    %cst_12 = arith.constant dense<0.000000e+00> : vector<16x16xf32>
    %9 = tpu.matmul %3, %8, %cst_12 {dimension_numbers = #tpu.dot_dimension_numbers<[1], [0], [0], [1], [0, 0, 1, 1], [], []>} : vector<16x32xbf16>, vector<32x16xbf16>, vector<16x16xf32> -> vector<16x16xf32>
    %10 = vector.shape_cast %5 : vector<16x16xf32> to vector<2x8x16xf32>
    %11 = vector.shape_cast %7 : vector<16x16xf32> to vector<2x8x16xf32>
    %12 = vector.shape_cast %9 : vector<16x16xf32> to vector<2x8x16xf32>
    %13 = arith.truncf %12 : vector<2x8x16xf32> to vector<2x8x16xbf16>
    "tpu.trace_start"() <{level = 10 : i32, message = "bqh,bkh->bqk"}> : () -> ()
    %cst_13 = arith.constant dense<0.000000e+00> : vector<2x8x8xf32>
    %14 = tpu.matmul %10, %11, %cst_13 {dimension_numbers = #tpu.dot_dimension_numbers<[2], [2], [1], [1], [0, 0, 0, 1, 1, 1], [0], [0]>} : vector<2x8x16xf32>, vector<2x8x16xf32>, vector<2x8x8xf32> -> vector<2x8x8xf32>
    "tpu.trace_stop"() : () -> ()
    %c0_14 = arith.constant 0 : index
    %c0_15 = arith.constant 0 : index
    %15 = vector.load %arg5[%c0_14, %c0_15] : memref<8x8xf32, #tpu.memory_space<vmem>>, vector<8x8xf32>
    %16 = vector.shape_cast %15 : vector<8x8xf32> to vector<1x8x8xf32>
    %17 = vector.broadcast %16 : vector<1x8x8xf32> to vector<2x8x8xf32>
    %18 = arith.addf %14, %17 : vector<2x8x8xf32>
    %c0_16 = arith.constant 0 : index
    %c0_17 = arith.constant 0 : index
    %c0_18 = arith.constant 0 : index
    %19 = vector.load %arg4[%c0_16, %c0_17, %c0_18] : memref<2x1x8xf32, #tpu.memory_space<vmem>>, vector<2x1x8xf32>
    %20 = vector.broadcast %19 : vector<2x1x8xf32> to vector<2x8x8xf32>
    %21 = arith.addf %18, %20 : vector<2x8x8xf32>
    %cst_19 = arith.constant dense<0xFF800000> : vector<2x8xf32>
    %22 = vector.multi_reduction <maximumf>, %21, %cst_19 [2] : vector<2x8x8xf32> to vector<2x8xf32>
    %23 = vector.shape_cast %22 : vector<2x8xf32> to vector<2x8x1xf32>
    %24 = vector.broadcast %23 : vector<2x8x1xf32> to vector<2x8x8xf32>
    %25 = arith.subf %21, %24 : vector<2x8x8xf32>
    %26 = math.exp %25 : vector<2x8x8xf32>
    %cst_20 = arith.constant dense<0.000000e+00> : vector<2x8xf32>
    %27 = vector.multi_reduction <add>, %26, %cst_20 [2] : vector<2x8x8xf32> to vector<2x8xf32>
    %28 = vector.shape_cast %27 : vector<2x8xf32> to vector<2x8x1xf32>
    %29 = tpu.reciprocal %28 {approx = true} : vector<2x8x1xf32> -> vector<2x8x1xf32>
    %30 = vector.broadcast %29 : vector<2x8x1xf32> to vector<2x8x8xf32>
    %31 = arith.mulf %26, %30 : vector<2x8x8xf32>
    %32 = arith.truncf %31 : vector<2x8x8xf32> to vector<2x8x8xbf16>
    %c0_21 = arith.constant 0 : index
    %c0_22 = arith.constant 0 : index
    %c0_23 = arith.constant 0 : index
    %33 = vector.load %arg10[%c0_21, %c0_22, %c0_23] : memref<2x8x8xbf16, #tpu.memory_space<vmem>>, vector<2x8x8xbf16>
    tpu.vector_store %arg10[%c0_21, %c0_22, %c0_23], %32 {strides = array<i32>} : memref<2x8x8xbf16, #tpu.memory_space<vmem>>, vector<2x8x8xbf16>,
    %34 = arith.truncf %26 : vector<2x8x8xf32> to vector<2x8x8xbf16>
    "tpu.trace_start"() <{level = 10 : i32, message = "bqk,bkh->bqh"}> : () -> ()
    %cst_24 = arith.constant dense<0.000000e+00> : vector<2x8x16xf32>
    %35 = tpu.matmul %34, %13, %cst_24 {dimension_numbers = #tpu.dot_dimension_numbers<[2], [1], [1], [2], [0, 0, 0, 1, 1, 2], [0], [0]>} : vector<2x8x8xbf16>, vector<2x8x16xbf16>, vector<2x8x16xf32> -> vector<2x8x16xf32>
    "tpu.trace_stop"() : () -> ()
    %36 = vector.broadcast %29 : vector<2x8x1xf32> to vector<2x8x16xf32>
    %37 = arith.mulf %35, %36 : vector<2x8x16xf32>
    %c0_25 = arith.constant 0 : index
    %c0_26 = arith.constant 0 : index
    %c0_27 = arith.constant 0 : index
    %38 = vector.load %arg9[%c0_25, %c0_26, %c0_27] : memref<2x8x16xf32, #tpu.memory_space<vmem>>, vector<2x8x16xf32>
    tpu.vector_store %arg9[%c0_25, %c0_26, %c0_27], %37 {strides = array<i32>} : memref<2x8x16xf32, #tpu.memory_space<vmem>>, vector<2x8x16xf32>,
    return
  }
  func.func @transform_0(%arg0: i32, %arg1: i32) -> (i32, i32, i32) {
    %c0_i32 = arith.constant 0 : i32
    %c0_i32_0 = arith.constant 0 : i32
    return %arg0, %arg1, %c0_i32 : i32, i32, i32
  }
  func.func @transform_1(%arg0: i32, %arg1: i32) -> (i32, i32, i32) {
    %c0_i32 = arith.constant 0 : i32
    %c0_i32_0 = arith.constant 0 : i32
    %c0_i32_1 = arith.constant 0 : i32
    return %arg0, %c0_i32, %c0_i32_0 : i32, i32, i32
  }
  func.func @transform_2(%arg0: i32, %arg1: i32) -> (i32, i32, i32) {
    %c0_i32 = arith.constant 0 : i32
    %c0_i32_0 = arith.constant 0 : i32
    %c0_i32_1 = arith.constant 0 : i32
    return %arg0, %c0_i32, %c0_i32_0 : i32, i32, i32
  }
  func.func @transform_3(%arg0: i32, %arg1: i32) -> (i32, i32) {
    %c0_i32 = arith.constant 0 : i32
    %c0_i32_0 = arith.constant 0 : i32
    return %arg1, %c0_i32 : i32, i32
  }
  func.func @transform_4(%arg0: i32, %arg1: i32) -> (i32, i32) {
    %c0_i32 = arith.constant 0 : i32
    %c0_i32_0 = arith.constant 0 : i32
    %c0_i32_1 = arith.constant 0 : i32
    return %c0_i32, %c0_i32_0 : i32, i32
  }
  func.func @transform_5(%arg0: i32, %arg1: i32) -> (i32, i32) {
    %c0_i32 = arith.constant 0 : i32
    %c0_i32_0 = arith.constant 0 : i32
    %c0_i32_1 = arith.constant 0 : i32
    return %c0_i32, %c0_i32_0 : i32, i32
  }
  func.func @transform_6(%arg0: i32, %arg1: i32) -> (i32, i32) {
    %c0_i32 = arith.constant 0 : i32
    %c0_i32_0 = arith.constant 0 : i32
    %c0_i32_1 = arith.constant 0 : i32
    return %c0_i32, %c0_i32_0 : i32, i32
  }
  func.func @transform_7(%arg0: i32, %arg1: i32) -> (i32, i32, i32) {
    %c0_i32 = arith.constant 0 : i32
    %c0_i32_0 = arith.constant 0 : i32
    return %arg0, %arg1, %c0_i32 : i32, i32, i32
  }
  func.func @transform_8(%arg0: i32, %arg1: i32) -> (i32, i32, i32) {
    %c0_i32 = arith.constant 0 : i32
    %c0_i32_0 = arith.constant 0 : i32
    return %arg0, %arg1, %c0_i32 : i32, i32, i32
  }
}

</mosaic_0001>

<llo_original>
// kernel: tpu_custom_call.1
$region0: #{tpu_custom_call.1}
  #allocation0 [shape = 'u32[]', space=smem, size = 0x4, offset = 0x4, fixed_abs, tag = 'smem constant byte address 0x4 - core index']
  #allocation1 [shape = 'u32[144,128]{1,0:T(1,128)}', space=vmem, size = 0x12000, scoped, tag = 'internal scratch']
  %s0 = inlined_call_operand.vmem [shape: bf16[2,8,32], index: 0, kind: input, shape index: {}]
  %s1 = inlined_call_operand.vmem [shape: bf16[2,8,32], index: 1, kind: input, shape index: {}]
  %s2 = inlined_call_operand.vmem [shape: f32[2,1,8], index: 2, kind: input, shape index: {}]
  %s3 = inlined_call_operand.vmem [shape: f32[8,8], index: 3, kind: input, shape index: {}]
  %s4 = inlined_call_operand.vmem [shape: bf16[32,16], index: 4, kind: input, shape index: {}]
  %s5 = inlined_call_operand.vmem [shape: bf16[32,16], index: 5, kind: input, shape index: {}]
  %s6 = inlined_call_operand.vmem [shape: bf16[32,16], index: 6, kind: input, shape index: {}]
  %s7 = inlined_call_operand.hbm [shape: f32[2,8,16], index: 7, kind: output, shape index: {0}]
  %s8 = inlined_call_operand.hbm [shape: bf16[2,8,8], index: 8, kind: output, shape index: {1}]
  %9 = xla_tuple %s7, %s8
  %s10 = sld [smem:[#allocation0]]
  $region46: #{tpu_custom_call.1} parent=0
    _
  %s12 = ssub.s32 1, %s10
  %s13 = scalar_select 0, %s12, %s10
  $region1: #{tpu_custom_call.1} parent=0
    #allocation2 [shape = 'u8[8192]{0}', space=vmem, size = 0x2000, scoped, tag = 'output window, operand 0, single buffered']
    #allocation3 [shape = 's32[1]{0}', space=sflag, size = 0x4, scoped, tag = 'scoped memory for tpu_custom_call.1']
    #allocation4 [shape = 'u8[4096]{0}', space=vmem, size = 0x1000, scoped, tag = 'output window, operand 1, single buffered']
    #allocation5 [shape = 's32[1]{0}', space=sflag, size = 0x4, scoped, tag = 'scoped memory for tpu_custom_call.1']
    %14 = vsyncpa [#allocation3], 0
    %15 = vsyncpa [#allocation5], 0
    // Predicated region
    $region2: #{tpu_custom_call.1} parent=1 // pred_check
      _
    $region3: #{tpu_custom_call.1} parent=1 // pred_check_branch
      %17 = sbr.rel (0) target = $region5
    $region4: #{tpu_custom_call.1} parent=1 // pred_region
      _
    $region5: #{tpu_custom_call.1} parent=1 // pred_fallthru
      _
    // Predicated region
    $region6: #{tpu_custom_call.1} parent=1 // pred_check
      _
    $region7: #{tpu_custom_call.1} parent=1 // pred_check_branch
      %19 = sbr.rel (0) target = $region9
    $region8: #{tpu_custom_call.1} parent=1 // pred_region
      _
    $region9: #{tpu_custom_call.1} parent=1 // pred_fallthru
      _
    // Predicated region
    $region10: #{tpu_custom_call.1} parent=1 // pred_check
      _
    $region11: #{tpu_custom_call.1} parent=1 // pred_check_branch
      %21 = sbr.rel (0) target = $region13
    $region12: #{tpu_custom_call.1} parent=1 // pred_region
      _
    $region13: #{tpu_custom_call.1} parent=1 // pred_fallthru
      _
    // Predicated region
    $region14: #{tpu_custom_call.1} parent=1 // pred_check
      _
    $region15: #{tpu_custom_call.1} parent=1 // pred_check_branch
      %23 = sbr.rel (0) target = $region17
    $region16: #{tpu_custom_call.1} parent=1 // pred_region
      _
    $region17: #{tpu_custom_call.1} parent=1 // pred_fallthru
      _
    // Predicated region
    $region18: #{tpu_custom_call.1} parent=1 // pred_check
      _
    $region19: #{tpu_custom_call.1} parent=1 // pred_check_branch
      %25 = sbr.rel (0) target = $region21
    $region20: #{tpu_custom_call.1} parent=1 // pred_region
      _
    $region21: #{tpu_custom_call.1} parent=1 // pred_fallthru
      _
    // Predicated region
    $region22: #{tpu_custom_call.1} parent=1 // pred_check
      _
    $region23: #{tpu_custom_call.1} parent=1 // pred_check_branch
      %27 = sbr.rel (0) target = $region25
    $region24: #{tpu_custom_call.1} parent=1 // pred_region
      _
    $region25: #{tpu_custom_call.1} parent=1 // pred_fallthru
      _
    // Predicated region
    $region26: #{tpu_custom_call.1} parent=1 // pred_check
      _
    $region27: #{tpu_custom_call.1} parent=1 // pred_check_branch
      %29 = sbr.rel (0) target = $region29
    $region28: #{tpu_custom_call.1} parent=1 // pred_region
      _
    $region29: #{tpu_custom_call.1} parent=1 // pred_fallthru
      _
    %v31 = vld [vmem:[%s0] sm:$0xf]
    %v32 = vld [vmem:[%s0 + $0x4] sm:$0xf]
    %v33 = vld [vmem:[%s1] sm:$0xf]
    %v34 = vld [vmem:[%s1 + $0x4] sm:$0xf]
    %v35 = vld [vmem:[%s4] sm:$0xf]
    %v36 = vld [vmem:[%s4 + $0x4] sm:$0xf]
    %v37 = vld [vmem:[%s4 + $0x8] sm:$0xf]
    %v38 = vld [vmem:[%s4 + $0xc] sm:$0xf]
    %v41 = vunpack.c.l.b16 %v31
    %v42 = vunpack.c.l.b16 %v32
    %v43 = vpack.c.b16 %v42, %v41
    %v48 = vunpack.c.l.b16 %v35
    %v49 = vunpack.c.l.b16 %v36
    %v50 = vunpack.c.l.b16 %v37
    %v51 = vunpack.c.l.b16 %v38
    %v52 = vpack.c.b16 %v49, %v48
    %v53 = vpack.c.b16 %v51, %v50
    %vm56 = vcmask 261120
    %v58 = vsel %vm56, %v43, 0
    %60 = vmatprep.subr.bf16.mxu0 0
    %61 = vmatpush1.bf16.msra.mxu0 0
    %62 = vmatprep.subr.bf16.mxu0 0
    %63 = vmatpush1.bf16.msra.mxu0 0
    %64 = vmatprep.subr.bf16.mxu0 0
    %65 = vmatpush1.bf16.msra.mxu0 0
    %66 = vmatprep.subr.bf16.mxu0 0
    %67 = vmatpush1.bf16.msra.mxu0 0
    %68 = vmatprep.subr.bf16.mxu0 0
    %69 = vmatpush1.bf16.msra.mxu0 0
    %70 = vmatprep.subr.bf16.mxu0 0
    %71 = vmatpush1.bf16.msra.mxu0 0
    %72 = vmatprep.subr.bf16.mxu0 0
    %73 = vmatpush1.bf16.msra.mxu0 %v53
    %74 = vmatprep.subr.bf16.mxu0 0
    %75 = vmatpush1.bf16.msra.mxu0 %v52
    %76 = vmatprep.subr.bf16.mxu0 0
    %77 = vmatpush2.bf16.msra.mxu0 0
    %78 = vmatprep.subr.bf16.mxu0 0
    %79 = vmatpush2.bf16.msra.mxu0 0
    %80 = vmatprep.subr.bf16.mxu0 0
    %81 = vmatpush2.bf16.msra.mxu0 0
    %82 = vmatprep.subr.bf16.mxu0 0
    %83 = vmatpush2.bf16.msra.mxu0 0
    %84 = vmatprep.subr.bf16.mxu0 0
    %85 = vmatpush2.bf16.msra.mxu0 0
    %86 = vmatprep.subr.bf16.mxu0 0
    %87 = vmatpush2.bf16.msra.mxu0 0
    %88 = vmatprep.subr.bf16.mxu0 0
    %89 = vmatpush2.bf16.msra.mxu0 0
    %90 = vmatprep.subr.bf16.mxu0 0
    %91 = vmatpush2.bf16.msra.mxu0 0
    %92 = vmatprep.mubr.bf16.mxu0 0
    %93 = vmatmul.mubr.bf16.gmra.mxu0 %v58
    %v94 = vpop.f32.mrf.mxu0
    %v95 = vadd.f32 0.0, %v94
    %v96 = vpop.f32.mrf.mxu0
    %v97 = vpop.f32.mrf.mxu0
    %v98 = vadd.f32 0.0, %v97
    %v99 = vpop.f32.mrf.mxu0
    %100 = vdwg.mxu0
    %v101 = vld [vmem:[%s5] sm:$0xf]
    %v102 = vld [vmem:[%s5 + $0x4] sm:$0xf]
    %v103 = vld [vmem:[%s5 + $0x8] sm:$0xf]
    %v104 = vld [vmem:[%s5 + $0xc] sm:$0xf]
    %v107 = vunpack.c.l.b16 %v33
    %v108 = vunpack.c.l.b16 %v34
    %v109 = vpack.c.b16 %v108, %v107
    %v114 = vunpack.c.l.b16 %v101
    %v115 = vunpack.c.l.b16 %v102
    %v116 = vunpack.c.l.b16 %v103
    %v117 = vunpack.c.l.b16 %v104
    %v118 = vpack.c.b16 %v115, %v114
    %v119 = vpack.c.b16 %v117, %v116
    %v123 = vsel %vm56, %v109, 0
    %125 = vmatprep.subr.bf16.mxu0 0
    %126 = vmatpush1.bf16.msra.mxu0 0
    %127 = vmatprep.subr.bf16.mxu0 0
    %128 = vmatpush1.bf16.msra.mxu0 0
    %129 = vmatprep.subr.bf16.mxu0 0
    %130 = vmatpush1.bf16.msra.mxu0 0
    %131 = vmatprep.subr.bf16.mxu0 0
    %132 = vmatpush1.bf16.msra.mxu0 0
    %133 = vmatprep.subr.bf16.mxu0 0
    %134 = vmatpush1.bf16.msra.mxu0 0
    %135 = vmatprep.subr.bf16.mxu0 0
    %136 = vmatpush1.bf16.msra.mxu0 0
    %137 = vmatprep.subr.bf16.mxu0 0
    %138 = vmatpush1.bf16.msra.mxu0 %v119
    %139 = vmatprep.subr.bf16.mxu0 0
    %140 = vmatpush1.bf16.msra.mxu0 %v118
    %141 = vmatprep.subr.bf16.mxu0 0
    %142 = vmatpush2.bf16.msra.mxu0 0
    %143 = vmatprep.subr.bf16.mxu0 0
    %144 = vmatpush2.bf16.msra.mxu0 0
    %145 = vmatprep.subr.bf16.mxu0 0
    %146 = vmatpush2.bf16.msra.mxu0 0
    %147 = vmatprep.subr.bf16.mxu0 0
    %148 = vmatpush2.bf16.msra.mxu0 0
    %149 = vmatprep.subr.bf16.mxu0 0
    %150 = vmatpush2.bf16.msra.mxu0 0
    %151 = vmatprep.subr.bf16.mxu0 0
    %152 = vmatpush2.bf16.msra.mxu0 0
    %153 = vmatprep.subr.bf16.mxu0 0
    %154 = vmatpush2.bf16.msra.mxu0 0
    %155 = vmatprep.subr.bf16.mxu0 0
    %156 = vmatpush2.bf16.msra.mxu0 0
    %157 = vmatprep.mubr.bf16.mxu0 0
    %158 = vmatmul.mubr.bf16.gmra.mxu0 %v123
    %v159 = vpop.f32.mrf.mxu0
    %v160 = vadd.f32 0.0, %v159
    %v161 = vpop.f32.mrf.mxu0
    %v162 = vpop.f32.mrf.mxu0
    %v163 = vadd.f32 0.0, %v162
    %v164 = vpop.f32.mrf.mxu0
    %165 = vdwg.mxu0
    %v166 = vld [vmem:[%s6] sm:$0xf]
    %v167 = vld [vmem:[%s6 + $0x4] sm:$0xf]
    %v168 = vld [vmem:[%s6 + $0x8] sm:$0xf]
    %v169 = vld [vmem:[%s6 + $0xc] sm:$0xf]
    %v174 = vunpack.c.l.b16 %v166
    %v175 = vunpack.c.l.b16 %v167
    %v176 = vunpack.c.l.b16 %v168
    %v177 = vunpack.c.l.b16 %v169
    %v178 = vpack.c.b16 %v175, %v174
    %v179 = vpack.c.b16 %v177, %v176
    %182 = vmatprep.subr.bf16.mxu0 0
    %183 = vmatpush1.bf16.msra.mxu0 0
    %184 = vmatprep.subr.bf16.mxu0 0
    %185 = vmatpush1.bf16.msra.mxu0 0
    %186 = vmatprep.subr.bf16.mxu0 0
    %187 = vmatpush1.bf16.msra.mxu0 0
    %188 = vmatprep.subr.bf16.mxu0 0
    %189 = vmatpush1.bf16.msra.mxu0 0
    %190 = vmatprep.subr.bf16.mxu0 0
    %191 = vmatpush1.bf16.msra.mxu0 0
    %192 = vmatprep.subr.bf16.mxu0 0
    %193 = vmatpush1.bf16.msra.mxu0 0
    %194 = vmatprep.subr.bf16.mxu0 0
    %195 = vmatpush1.bf16.msra.mxu0 %v179
    %196 = vmatprep.subr.bf16.mxu0 0
    %197 = vmatpush1.bf16.msra.mxu0 %v178
    %198 = vmatprep.subr.bf16.mxu0 0
    %199 = vmatpush2.bf16.msra.mxu0 0
    %200 = vmatprep.subr.bf16.mxu0 0
    %201 = vmatpush2.bf16.msra.mxu0 0
    %202 = vmatprep.subr.bf16.mxu0 0
    %203 = vmatpush2.bf16.msra.mxu0 0
    %204 = vmatprep.subr.bf16.mxu0 0
    %205 = vmatpush2.bf16.msra.mxu0 0
    %206 = vmatprep.subr.bf16.mxu0 0
    %207 = vmatpush2.bf16.msra.mxu0 0
    %208 = vmatprep.subr.bf16.mxu0 0
    %209 = vmatpush2.bf16.msra.mxu0 0
    %210 = vmatprep.subr.bf16.mxu0 0
    %211 = vmatpush2.bf16.msra.mxu0 0
    %212 = vmatprep.subr.bf16.mxu0 0
    %213 = vmatpush2.bf16.msra.mxu0 0
    %214 = vmatprep.mubr.bf16.mxu0 0
    %215 = vmatmul.mubr.bf16.gmra.mxu0 %v123
    %v216 = vpop.f32.mrf.mxu0
    %v217 = vadd.f32 0.0, %v216
    %v218 = vpop.f32.mrf.mxu0
    %v219 = vpop.f32.mrf.mxu0
    %v220 = vadd.f32 0.0, %v219
    %v221 = vpop.f32.mrf.mxu0
    %222 = vdwg.mxu0
    %v223 = vpack.c.bf16 %v217, %v217
    %v224 = vpack.c.bf16 %v220, %v220
    %v225 = vld [vmem:[%s3] sm:$0xff]
    %vm226 = vcmask 130048
    %v228 = vsel %vm226, %v95, 0
    %v231 = vsel %vm226, %v160, 0
    %233 = vmatprep.subr.mxu0 0.0
    %234 = vmatpush1.xpose.msra.mxu0 0.0
    %235 = vmatprep.subr.mxu0 0.0
    %236 = vmatpush1.xpose.msra.mxu0 0.0
    %237 = vmatprep.subr.mxu0 0.0
    %238 = vmatpush1.xpose.msra.mxu0 0.0
    %239 = vmatprep.subr.mxu0 0.0
    %240 = vmatpush1.xpose.msra.mxu0 0.0
    %241 = vmatprep.subr.mxu0 0.0
    %242 = vmatpush1.xpose.msra.mxu0 0.0
    %243 = vmatprep.subr.mxu0 0.0
    %244 = vmatpush1.xpose.msra.mxu0 0.0
    %245 = vmatprep.subr.mxu0 0.0
    %246 = vmatpush1.xpose.msra.mxu0 0.0
    %247 = vmatprep.subr.mxu0 0.0
    %248 = vmatpush1.xpose.msra.mxu0 0.0
    %249 = vmatprep.subr.mxu0 0.0
    %250 = vmatpush1.xpose.msra.mxu0 0.0
    %251 = vmatprep.subr.mxu0 0.0
    %252 = vmatpush1.xpose.msra.mxu0 0.0
    %253 = vmatprep.subr.mxu0 0.0
    %254 = vmatpush1.xpose.msra.mxu0 0.0
    %255 = vmatprep.subr.mxu0 0.0
    %256 = vmatpush1.xpose.msra.mxu0 0.0
    %257 = vmatprep.subr.mxu0 0.0
    %258 = vmatpush1.xpose.msra.mxu0 0.0
    %259 = vmatprep.subr.mxu0 0.0
    %260 = vmatpush1.xpose.msra.mxu0 0.0
    %261 = vmatprep.subr.mxu0 0.0
    %262 = vmatpush1.xpose.msra.mxu0 0.0
    %263 = vmatprep.subr.mxu0 0.0
    %264 = vmatpush1.xpose.msra.mxu0 %v231
    %265 = vmatprep.subr.mxu0 0.0
    %266 = vmatpush2.xpose.msra.mxu0 0.0
    %267 = vmatprep.subr.mxu0 0.0
    %268 = vmatpush2.xpose.msra.mxu0 0.0
    %269 = vmatprep.subr.mxu0 0.0
    %270 = vmatpush2.xpose.msra.mxu0 0.0
    %271 = vmatprep.subr.mxu0 0.0
    %272 = vmatpush2.xpose.msra.mxu0 0.0
    %273 = vmatprep.subr.mxu0 0.0
    %274 = vmatpush2.xpose.msra.mxu0 0.0
    %275 = vmatprep.subr.mxu0 0.0
    %276 = vmatpush2.xpose.msra.mxu0 0.0
    %277 = vmatprep.subr.mxu0 0.0
    %278 = vmatpush2.xpose.msra.mxu0 0.0
    %279 = vmatprep.subr.mxu0 0.0
    %280 = vmatpush2.xpose.msra.mxu0 0.0
    %281 = vmatprep.subr.mxu0 0.0
    %282 = vmatpush2.xpose.msra.mxu0 0.0
    %283 = vmatprep.subr.mxu0 0.0
    %284 = vmatpush2.xpose.msra.mxu0 0.0
    %285 = vmatprep.subr.mxu0 0.0
    %286 = vmatpush2.xpose.msra.mxu0 0.0
    %287 = vmatprep.subr.mxu0 0.0
    %288 = vmatpush2.xpose.msra.mxu0 0.0
    %289 = vmatprep.subr.mxu0 0.0
    %290 = vmatpush2.xpose.msra.mxu0 0.0
    %291 = vmatprep.subr.mxu0 0.0
    %292 = vmatpush2.xpose.msra.mxu0 0.0
    %293 = vmatprep.subr.mxu0 0.0
    %294 = vmatpush2.xpose.msra.mxu0 0.0
    %295 = vmatprep.subr.mxu0 0.0
    %296 = vmatpush2.xpose.msra.mxu0 0.0
    %297 = vmatprep.mubr.f32.mxu0 0.0
    %298 = vmatmul.mubr.f32.gmra.mxu0 %v228
    %v299 = vpop.f32.mrf.mxu0
    %v300 = vadd.f32 %v225, %v299
    %v301 = vpop.f32.mrf.mxu0
    %302 = vdwg.mxu0
    %v304 = vsel %vm226, %v98, 0
    %v307 = vsel %vm226, %v163, 0
    %309 = vmatprep.subr.mxu0 0.0
    %310 = vmatpush1.xpose.msra.mxu0 0.0
    %311 = vmatprep.subr.mxu0 0.0
    %312 = vmatpush1.xpose.msra.mxu0 0.0
    %313 = vmatprep.subr.mxu0 0.0
    %314 = vmatpush1.xpose.msra.mxu0 0.0
    %315 = vmatprep.subr.mxu0 0.0
    %316 = vmatpush1.xpose.msra.mxu0 0.0
    %317 = vmatprep.subr.mxu0 0.0
    %318 = vmatpush1.xpose.msra.mxu0 0.0
    %319 = vmatprep.subr.mxu0 0.0
    %320 = vmatpush1.xpose.msra.mxu0 0.0
    %321 = vmatprep.subr.mxu0 0.0
    %322 = vmatpush1.xpose.msra.mxu0 0.0
    %323 = vmatprep.subr.mxu0 0.0
    %324 = vmatpush1.xpose.msra.mxu0 0.0
    %325 = vmatprep.subr.mxu0 0.0
    %326 = vmatpush1.xpose.msra.mxu0 0.0
    %327 = vmatprep.subr.mxu0 0.0
    %328 = vmatpush1.xpose.msra.mxu0 0.0
    %329 = vmatprep.subr.mxu0 0.0
    %330 = vmatpush1.xpose.msra.mxu0 0.0
    %331 = vmatprep.subr.mxu0 0.0
    %332 = vmatpush1.xpose.msra.mxu0 0.0
    %333 = vmatprep.subr.mxu0 0.0
    %334 = vmatpush1.xpose.msra.mxu0 0.0
    %335 = vmatprep.subr.mxu0 0.0
    %336 = vmatpush1.xpose.msra.mxu0 0.0
    %337 = vmatprep.subr.mxu0 0.0
    %338 = vmatpush1.xpose.msra.mxu0 0.0
    %339 = vmatprep.subr.mxu0 0.0
    %340 = vmatpush1.xpose.msra.mxu0 %v307
    %341 = vmatprep.subr.mxu0 0.0
    %342 = vmatpush2.xpose.msra.mxu0 0.0
    %343 = vmatprep.subr.mxu0 0.0
    %344 = vmatpush2.xpose.msra.mxu0 0.0
    %345 = vmatprep.subr.mxu0 0.0
    %346 = vmatpush2.xpose.msra.mxu0 0.0
    %347 = vmatprep.subr.mxu0 0.0
    %348 = vmatpush2.xpose.msra.mxu0 0.0
    %349 = vmatprep.subr.mxu0 0.0
    %350 = vmatpush2.xpose.msra.mxu0 0.0
    %351 = vmatprep.subr.mxu0 0.0
    %352 = vmatpush2.xpose.msra.mxu0 0.0
    %353 = vmatprep.subr.mxu0 0.0
    %354 = vmatpush2.xpose.msra.mxu0 0.0
    %355 = vmatprep.subr.mxu0 0.0
    %356 = vmatpush2.xpose.msra.mxu0 0.0
    %357 = vmatprep.subr.mxu0 0.0
    %358 = vmatpush2.xpose.msra.mxu0 0.0
    %359 = vmatprep.subr.mxu0 0.0
    %360 = vmatpush2.xpose.msra.mxu0 0.0
    %361 = vmatprep.subr.mxu0 0.0
    %362 = vmatpush2.xpose.msra.mxu0 0.0
    %363 = vmatprep.subr.mxu0 0.0
    %364 = vmatpush2.xpose.msra.mxu0 0.0
    %365 = vmatprep.subr.mxu0 0.0
    %366 = vmatpush2.xpose.msra.mxu0 0.0
    %367 = vmatprep.subr.mxu0 0.0
    %368 = vmatpush2.xpose.msra.mxu0 0.0
    %369 = vmatprep.subr.mxu0 0.0
    %370 = vmatpush2.xpose.msra.mxu0 0.0
    %371 = vmatprep.subr.mxu0 0.0
    %372 = vmatpush2.xpose.msra.mxu0 0.0
    %373 = vmatprep.mubr.f32.mxu0 0.0
    %374 = vmatmul.mubr.f32.gmra.mxu0 %v304
    %v375 = vpop.f32.mrf.mxu0
    %v376 = vadd.f32 %v225, %v375
    %v377 = vpop.f32.mrf.mxu0
    %378 = vdwg.mxu0
    %v379 = vld [vmem:[%s2] sm:$0x1]
    %v380 = vld [vmem:[%s2 + $0x1] sm:$0x1]
    %v383 = vlaneseq
    %v384 = vshrl.u32 %v383, 7
    %v385 = vsub.s32 0, %v384
    %v386 = vrot.slane %v379, %v385
    %v387 = vlaneseq
    %v388 = vshrl.u32 %v387, 7
    %v389 = vsub.s32 0, %v388
    %v390 = vrot.slane %v380, %v389
    %v393 = vadd.f32 %v300, %v386
    %v394 = vadd.f32 %v376, %v390
    %vm395 = vcmask 64512
    %v396 = vsel %vm395, %v393, -inf
    %397 = vmax.xlane.f32.xlu0 %v396
    %v398 = vpop.xlane.xlu0 %397
    %v399 = vsel %vm395, %v394, -inf
    %400 = vmax.xlane.f32.xlu0 %v399
    %v401 = vpop.xlane.xlu0 %400
    %v402 = vsub.f32 %v393, %v398
    %v403 = vsub.f32 %v394, %v401
    %v404 = vmul.f32 %v402, 1.442695
    %v405 = vpow.pop %v404
    %v406 = vmul.f32 %v403, 1.442695
    %v407 = vpow.pop %v406
    %v408 = vsel %vm395, %v405, 0.0
    %409 = vadd.xlane.f32.xlu0 %v408
    %v410 = vpop.xlane.xlu0 %409
    %v411 = vsel %vm395, %v407, 0.0
    %412 = vadd.xlane.f32.xlu0 %v411
    %v413 = vpop.xlane.xlu0 %412
    %v414 = vrcp.pop %v410
    %v415 = vrcp.pop %v413
    %v416 = vmul.f32 %v405, %v414
    %v417 = vmul.f32 %v407, %v415
    %v418 = vpack.c.bf16 %v416, %v416
    %v419 = vpack.c.bf16 %v417, %v417
    %vm420 = vcmask 60416
    %421 = vst.msk [vmem:[#allocation4] sm:$0xf] %vm420, %v418
    %422 = vst.msk [vmem:[#allocation4 + $0x4] sm:$0xf] %vm420, %v419
    %v423 = vpack.c.bf16 %v405, %v405
    %v424 = vpack.c.bf16 %v407, %v407
    %v426 = vsel %vm395, %v423, 0
    %vm428 = vcmask 1043456
    %v430 = vsel %vm428, %v223, 0
    %432 = vmatprep.subr.bf16.mxu0 0
    %433 = vmatpush1.bf16.msra.mxu0 0
    %434 = vmatprep.subr.bf16.mxu0 0
    %435 = vmatpush1.bf16.msra.mxu0 0
    %436 = vmatprep.subr.bf16.mxu0 0
    %437 = vmatpush1.bf16.msra.mxu0 0
    %438 = vmatprep.subr.bf16.mxu0 0
    %439 = vmatpush1.bf16.msra.mxu0 0
    %440 = vmatprep.subr.bf16.mxu0 0
    %441 = vmatpush1.bf16.msra.mxu0 0
    %442 = vmatprep.subr.bf16.mxu0 0
    %443 = vmatpush1.bf16.msra.mxu0 0
    %444 = vmatprep.subr.bf16.mxu0 0
    %445 = vmatpush1.bf16.msra.mxu0 0
    %446 = vmatprep.subr.bf16.mxu0 0
    %447 = vmatpush1.bf16.msra.mxu0 %v430
    %448 = vmatprep.subr.bf16.mxu0 0
    %449 = vmatpush2.bf16.msra.mxu0 0
    %450 = vmatprep.subr.bf16.mxu0 0
    %451 = vmatpush2.bf16.msra.mxu0 0
    %452 = vmatprep.subr.bf16.mxu0 0
    %453 = vmatpush2.bf16.msra.mxu0 0
    %454 = vmatprep.subr.bf16.mxu0 0
    %455 = vmatpush2.bf16.msra.mxu0 0
    %456 = vmatprep.subr.bf16.mxu0 0
    %457 = vmatpush2.bf16.msra.mxu0 0
    %458 = vmatprep.subr.bf16.mxu0 0
    %459 = vmatpush2.bf16.msra.mxu0 0
    %460 = vmatprep.subr.bf16.mxu0 0
    %461 = vmatpush2.bf16.msra.mxu0 0
    %462 = vmatprep.subr.bf16.mxu0 0
    %463 = vmatpush2.bf16.msra.mxu0 0
    %464 = vmatprep.mubr.bf16.mxu0 0
    %465 = vmatmul.mubr.bf16.gmra.mxu0 %v426
    %v466 = vpop.f32.mrf.mxu0
    %v467 = vadd.f32 0.0, %v466
    %v468 = vpop.f32.mrf.mxu0
    %v469 = vpop.f32.mrf.mxu0
    %v470 = vpop.f32.mrf.mxu0
    %471 = vdwg.mxu0
    %v473 = vsel %vm395, %v424, 0
    %v476 = vsel %vm428, %v224, 0
    %478 = vmatprep.subr.bf16.mxu0 0
    %479 = vmatpush1.bf16.msra.mxu0 0
    %480 = vmatprep.subr.bf16.mxu0 0
    %481 = vmatpush1.bf16.msra.mxu0 0
    %482 = vmatprep.subr.bf16.mxu0 0
    %483 = vmatpush1.bf16.msra.mxu0 0
    %484 = vmatprep.subr.bf16.mxu0 0
    %485 = vmatpush1.bf16.msra.mxu0 0
    %486 = vmatprep.subr.bf16.mxu0 0
    %487 = vmatpush1.bf16.msra.mxu0 0
    %488 = vmatprep.subr.bf16.mxu0 0
    %489 = vmatpush1.bf16.msra.mxu0 0
    %490 = vmatprep.subr.bf16.mxu0 0
    %491 = vmatpush1.bf16.msra.mxu0 0
    %492 = vmatprep.subr.bf16.mxu0 0
    %493 = vmatpush1.bf16.msra.mxu0 %v476
    %494 = vmatprep.subr.bf16.mxu0 0
    %495 = vmatpush2.bf16.msra.mxu0 0
    %496 = vmatprep.subr.bf16.mxu0 0
    %497 = vmatpush2.bf16.msra.mxu0 0
    %498 = vmatprep.subr.bf16.mxu0 0
    %499 = vmatpush2.bf16.msra.mxu0 0
    %500 = vmatprep.subr.bf16.mxu0 0
    %501 = vmatpush2.bf16.msra.mxu0 0
    %502 = vmatprep.subr.bf16.mxu0 0
    %503 = vmatpush2.bf16.msra.mxu0 0
    %504 = vmatprep.subr.bf16.mxu0 0
    %505 = vmatpush2.bf16.msra.mxu0 0
    %506 = vmatprep.subr.bf16.mxu0 0
    %507 = vmatpush2.bf16.msra.mxu0 0
    %508 = vmatprep.subr.bf16.mxu0 0
    %509 = vmatpush2.bf16.msra.mxu0 0
    %510 = vmatprep.mubr.bf16.mxu0 0
    %511 = vmatmul.mubr.bf16.gmra.mxu0 %v473
    %v512 = vpop.f32.mrf.mxu0
    %v513 = vadd.f32 0.0, %v512
    %v514 = vpop.f32.mrf.mxu0
    %v515 = vpop.f32.mrf.mxu0
    %v516 = vpop.f32.mrf.mxu0
    %517 = vdwg.mxu0
    %v518 = vmul.f32 %v467, %v414
    %v519 = vmul.f32 %v513, %v415
    %520 = vst.msk [vmem:[#allocation2] sm:$0xff] %vm226, %v518
    %521 = vst.msk [vmem:[#allocation2 + $0x8] sm:$0xff] %vm226, %v519
    // Predicated region
    $region30: #{tpu_custom_call.1} parent=1 // pred_check
      _
    $region31: #{tpu_custom_call.1} parent=1 // pred_check_branch
      %523 = sbr.rel (0) target = $region33
    $region32: #{tpu_custom_call.1} parent=1 // pred_region
      %s525 = ssub.s32 256, 256
      %526 = vsyncadd [#allocation3], %s525
      %s527 = sshll.u32 [#allocation2], 4
      %s528 = int_to_ptr.vmem [resolvable:$true] %s527
      %533 = dma.vmem_to_hbm [thread:$0]  %s528, 256, %s7, [#allocation3], 128, 128, 8
    $region33: #{tpu_custom_call.1} parent=1 // pred_fallthru
      _
    // Predicated region
    $region34: #{tpu_custom_call.1} parent=1 // pred_check
      _
    $region35: #{tpu_custom_call.1} parent=1 // pred_check_branch
      %535 = sbr.rel (0) target = $region37
    $region36: #{tpu_custom_call.1} parent=1 // pred_region
      %s537 = ssub.s32 128, 128
      %538 = vsyncadd [#allocation5], %s537
      %s539 = sshll.u32 [#allocation4], 4
      %s540 = int_to_ptr.vmem [resolvable:$true] %s539
      %545 = dma.vmem_to_hbm [thread:$0]  %s540, 128, %s8, [#allocation5], 64, 64, 4
    $region37: #{tpu_custom_call.1} parent=1 // pred_fallthru
      _
    // Predicated region
    $region38: #{tpu_custom_call.1} parent=1 // pred_check
      _
    $region39: #{tpu_custom_call.1} parent=1 // pred_check_branch
      %547 = sbr.rel (0) target = $region41
    $region40: #{tpu_custom_call.1} parent=1 // pred_region
      %548 = dma.done [#allocation3], 256
    $region41: #{tpu_custom_call.1} parent=1 // pred_fallthru
      _
    // Predicated region
    $region42: #{tpu_custom_call.1} parent=1 // pred_check
      _
    $region43: #{tpu_custom_call.1} parent=1 // pred_check_branch
      %550 = sbr.rel (0) target = $region45
    $region44: #{tpu_custom_call.1} parent=1 // pred_region
      %551 = dma.done [#allocation5], 128
    $region45: #{tpu_custom_call.1} parent=1 // pred_fallthru
      _
    %552 = vsyncpa [#allocation3], 1
    %553 = vsyncpa [#allocation5], 1

</llo_original>
